<compile_context>
chip_gen: v5e
topology: v5e:2x2
jax: 0.10.0
libtpu: 0.0.40
codegen_flags: <defaults>
</compile_context>

<pallas_src>
import functools

import jax
import jax.numpy as jnp
import numpy as np
from jax.experimental import pallas as pl
from jax.experimental.pallas import tpu as pltpu


def _round_up(n, k=128):
    return max(k, ((n + k - 1) // k) * k)


# -----------------------------------------------------------------------------
# Kernel
# -----------------------------------------------------------------------------
def _make_multigru_kernel(num_layers, m_pads, mm_dtype):
    """Fused kernel for `num_layers` stacked TF-GRU cells (one step).

    Ref order: x, per-layer (wx_all, wh_g, wh_c, b_all), h_0..h_{L-1},
    then outputs h_new_0..h_new_{L-1}.
    """
    L = num_layers

    def kernel(*refs):
        x_ref = refs[0]
        w_refs = refs[1:1 + 4 * L]
        h_refs = refs[1 + 4 * L:1 + 5 * L]
        out_refs = refs[1 + 5 * L:]

        # Hidden states (f32).  Hoist all h_i @ wh_g_i dots ahead of the serial
        # layer chain: they depend only on kernel inputs, so the MXU can
        # pipeline these independent 1-row matmuls back-to-back.
        hs = [h_refs[i][...] for i in range(L)]
        hg = []
        for i in range(L):
            wh_g = w_refs[4 * i + 1]
            hg.append(jnp.dot(hs[i].astype(mm_dtype), wh_g[...],
                              preferred_element_type=jnp.float32))

        x = x_ref[...]                                      # (1, n_pad_0) f32
        for i in range(L):                                  # statically unrolled
            wx_all, _, wh_c, b_all = w_refs[4 * i:4 * (i + 1)]
            m_pad = m_pads[i]
            h = hs[i]

            # One wide x matmul; columns are [gate_r | gate_z | candidate_x].
            xw = (jnp.dot(x.astype(mm_dtype), wx_all[...],
                          preferred_element_type=jnp.float32) + b_all[...])
            g = xw[:, :2 * m_pad] + hg[i]                   # gate pre-activations
            r = jax.nn.sigmoid(g[:, :m_pad])                # static 128-aligned slices
            z = jax.nn.sigmoid(g[:, m_pad:])

            rh = (r * h).astype(mm_dtype)
            c = xw[:, 2 * m_pad:] + jnp.dot(rh, wh_c[...],
                                            preferred_element_type=jnp.float32)
            h_new = z * h + (1.0 - z) * jnp.tanh(c)         # f32 elementwise
            out_refs[i][...] = h_new
            x = h_new                                       # feed next layer

    return kernel


# -----------------------------------------------------------------------------
# One-time weight packing (keep OUT of the per-step hot path)
# -----------------------------------------------------------------------------
def _pad2(a, rows, cols):
    return jnp.pad(a, ((0, rows - a.shape[0]), (0, cols - a.shape[1])))


def pack_multigru_params(params, in_size, out_sizes, mm_dtype=jnp.bfloat16):
    """Pack per-layer weights into 4 lane-dense buffers each.

    Per layer:
      wx_all (n_pad, 3*m_pad)  x-part of K_g (r|z columns) and of K_c, fused.
      wh_g   (m_pad, 2*m_pad)  h-part of K_g (r|z columns).
      wh_c   (m_pad,   m_pad)  h-part of K_c.
      b_all  (1,     3*m_pad)  [b_r | b_z | b_c], kept in f32.
    """
    L = len(out_sizes)
    sizes = (in_size,) + tuple(out_sizes)
    pads = tuple(_round_up(s) for s in sizes)

    packed = []
    for i in range(L):
        kg, bg, kc, bc = params[i]
        n, m = sizes[i], sizes[i + 1]
        n_pad, m_pad = pads[i], pads[i + 1]
        kg = jnp.asarray(kg, jnp.float32)
        kc = jnp.asarray(kc, jnp.float32)
        bg = jnp.asarray(bg, jnp.float32)
        bc = jnp.asarray(bc, jnp.float32)

        kg_x, kg_h = kg[:n], kg[n:]                 # (n, 2m), (m, 2m)
        kc_x, kc_h = kc[:n], kc[n:]                 # (n, m),  (m, m)

        wx_all = jnp.concatenate([_pad2(kg_x[:, :m], n_pad, m_pad),
                                  _pad2(kg_x[:, m:], n_pad, m_pad),
                                  _pad2(kc_x, n_pad, m_pad)], axis=1)
        wh_g = jnp.concatenate([_pad2(kg_h[:, :m], m_pad, m_pad),
                                _pad2(kg_h[:, m:], m_pad, m_pad)], axis=1)
        wh_c = _pad2(kc_h, m_pad, m_pad)
        b_all = jnp.concatenate([jnp.pad(bg[:m], (0, m_pad - m)),
                                 jnp.pad(bg[m:], (0, m_pad - m)),
                                 jnp.pad(bc, (0, m_pad - m))]).reshape(1, 3 * m_pad)

        packed.extend([wx_all.astype(mm_dtype), wh_g.astype(mm_dtype),
                       wh_c.astype(mm_dtype), b_all])
    return tuple(packed)


# -----------------------------------------------------------------------------
# Jitted per-step wrapper: only padding of x/h + the single pallas_call
# -----------------------------------------------------------------------------
@functools.partial(jax.jit, static_argnames=("in_size", "out_sizes", "mm_dtype"))
def multigru_step(x, h_list, packed, *, in_size, out_sizes,
                  mm_dtype=jnp.bfloat16):
    """x: (in_size,), h_list[i]: (out_sizes[i],) -> (x_out, [h_new_i])."""
    L = len(out_sizes)
    sizes = (in_size,) + tuple(out_sizes)
    pads = tuple(_round_up(s) for s in sizes)
    m_pads = pads[1:]

    x_p = jnp.pad(x.astype(jnp.float32), (0, pads[0] - sizes[0])).reshape(1, pads[0])
    h_p = [jnp.pad(jnp.asarray(h_list[i], jnp.float32),
                   (0, m_pads[i] - sizes[i + 1])).reshape(1, m_pads[i])
           for i in range(L)]

    vmem = pl.BlockSpec(memory_space=pltpu.MemorySpace.VMEM)
    kernel = _make_multigru_kernel(L, m_pads, mm_dtype)
    num_inputs = 1 + 4 * L + L

    # Advisory cost estimate + explicit VMEM limit sized from the packed weights.
    w_bytes = sum(int(np.prod(p.shape)) * int(p.dtype.itemsize) for p in packed)
    act_bytes = 4 * (pads[0] + 3 * sum(m_pads))           # x + h_in + h_out (f32)
    flops = 2 * sum(pads[i] * 3 * m_pads[i] + 2 * m_pads[i] * m_pads[i]
                    + m_pads[i] * m_pads[i] for i in range(L))
    cost = pl.CostEstimate(flops=flops, transcendentals=3 * sum(m_pads),
                           bytes_accessed=w_bytes + act_bytes)
    vmem_limit = int(min(100 * (1 << 20),
                         max(8 * (1 << 20), 2 * (w_bytes + act_bytes))))

    outs = pl.pallas_call(
        kernel,
        out_shape=tuple(jax.ShapeDtypeStruct((1, m_pads[i]), jnp.float32)
                        for i in range(L)),
        in_specs=[vmem] * num_inputs,
        out_specs=tuple([vmem] * L),
        # hidden-state inputs (last L operands) donate their buffers to h_new_i
        input_output_aliases={1 + 4 * L + i: i for i in range(L)},
        compiler_params=pltpu.CompilerParams(vmem_limit_bytes=vmem_limit),
        cost_estimate=cost,
    )(x_p, *packed, *h_p)

    h_new = [outs[i][0, :sizes[i + 1]] for i in range(L)]
    return h_new[-1], h_new


# -----------------------------------------------------------------------------
# Pure-JAX reference (mirror of the PyTorch MultiGRU.forward) for verification
# -----------------------------------------------------------------------------
def _reference_multigru(x, h_list, params, out_sizes):
    h_new = []
    for i, (kg, bg, kc, bc) in enumerate(params):
        m = out_sizes[i]
        gate_inputs = jnp.matmul(jnp.concatenate([x, h_list[i]]), kg) + bg
        value = jax.nn.sigmoid(gate_inputs)
        r, z = value[:m], value[m:]
        cand = jnp.matmul(jnp.concatenate([x, r * h_list[i]]), kc) + bc
        x = z * h_list[i] + (1.0 - z) * jnp.tanh(cand)
        h_new.append(x)
    return x, h_new


# -----------------------------------------------------------------------------
if __name__ == "__main__":
    voc_size = 16
    latent_vec_sizes = (32, 48, 64)
    sizes = (voc_size,) + latent_vec_sizes
    L = len(latent_vec_sizes)

    key = jax.random.PRNGKey(0)
    keys = jax.random.split(key, 4 * L + 1 + L)

    # Deterministic synthetic parameters (uniform [0,1), like np.random.rand).
    params = []
    for i in range(L):
        n, m = sizes[i], sizes[i + 1]
        kg = jax.random.uniform(keys[4 * i + 0], (n + m, 2 * m), dtype=jnp.float32)
        bg = jax.random.uniform(keys[4 * i + 1], (2 * m,), dtype=jnp.float32)
        kc = jax.random.uniform(keys[4 * i + 2], (n + m, m), dtype=jnp.float32)
        bc = jax.random.uniform(keys[4 * i + 3], (m,), dtype=jnp.float32)
        params.append((kg, bg, kc, bc))
    params = tuple(params)

    x = jax.random.normal(keys[4 * L], (voc_size,), dtype=jnp.float32)
    h_list = tuple(jax.random.normal(keys[4 * L + 1 + i], (latent_vec_sizes[i],),
                                     dtype=jnp.float32) for i in range(L))

    # Reference
    x_ref_out, h_ref = _reference_multigru(x, h_list, params, latent_vec_sizes)

    # Exact f32 matmul path
    packed_f32 = pack_multigru_params(params, voc_size, latent_vec_sizes,
                                      mm_dtype=jnp.float32)
    x_out, h_new = multigru_step(x, h_list, packed_f32, in_size=voc_size,
                                 out_sizes=latent_vec_sizes,
                                 mm_dtype=jnp.float32)
    x_out = jax.block_until_ready(x_out)
    np.testing.assert_allclose(np.asarray(x_out), np.asarray(x_ref_out),
                               rtol=1e-5, atol=1e-5)
    for i in range(L):
        np.testing.assert_allclose(np.asarray(h_new[i]), np.asarray(h_ref[i]),
                                   rtol=1e-5, atol=1e-5)

    # Default path: bf16 matmul operands, f32 accumulation / state.
    packed_bf16 = pack_multigru_params(params, voc_size, latent_vec_sizes)
    x_out_bf, h_new_bf = multigru_step(x, h_list, packed_bf16, in_size=voc_size,
                                       out_sizes=latent_vec_sizes)
    x_out_bf = jax.block_until_ready(x_out_bf)
    np.testing.assert_allclose(np.asarray(x_out_bf), np.asarray(x_ref_out),
                               rtol=5e-2, atol=5e-2)
    for i in range(L):
        np.testing.assert_allclose(np.asarray(h_new_bf[i]), np.asarray(h_ref[i]),
                                   rtol=5e-2, atol=5e-2)

    print("KERNEL_OK")
</pallas_src>

<mosaic_0001>
module attributes {stable_mosaic.version = 11 : i64} {
  func.func @kernel(%arg0: memref<1x128xf32, #tpu.memory_space<vmem>>, %arg1: memref<128x384xf32, #tpu.memory_space<vmem>>, %arg2: memref<128x256xf32, #tpu.memory_space<vmem>>, %arg3: memref<128x128xf32, #tpu.memory_space<vmem>>, %arg4: memref<1x384xf32, #tpu.memory_space<vmem>>, %arg5: memref<128x384xf32, #tpu.memory_space<vmem>>, %arg6: memref<128x256xf32, #tpu.memory_space<vmem>>, %arg7: memref<128x128xf32, #tpu.memory_space<vmem>>, %arg8: memref<1x384xf32, #tpu.memory_space<vmem>>, %arg9: memref<128x384xf32, #tpu.memory_space<vmem>>, %arg10: memref<128x256xf32, #tpu.memory_space<vmem>>, %arg11: memref<128x128xf32, #tpu.memory_space<vmem>>, %arg12: memref<1x384xf32, #tpu.memory_space<vmem>>, %arg13: memref<1x128xf32, #tpu.memory_space<vmem>>, %arg14: memref<1x128xf32, #tpu.memory_space<vmem>>, %arg15: memref<1x128xf32, #tpu.memory_space<vmem>>, %arg16: memref<1x128xf32, #tpu.memory_space<vmem>>, %arg17: memref<1x128xf32, #tpu.memory_space<vmem>>, %arg18: memref<1x128xf32, #tpu.memory_space<vmem>>) attributes {dimension_semantics = [], scalar_prefetch = 0 : i64, scratch_operands = 0 : i64, tpu.core_type = #tpu.core_type<tc>} {
    %c0 = arith.constant 0 : index
    %c0_0 = arith.constant 0 : index
    %0 = vector.load %arg13[%c0, %c0_0] : memref<1x128xf32, #tpu.memory_space<vmem>>, vector<1x128xf32>
    %c0_1 = arith.constant 0 : index
    %c0_2 = arith.constant 0 : index
    %1 = vector.load %arg14[%c0_1, %c0_2] : memref<1x128xf32, #tpu.memory_space<vmem>>, vector<1x128xf32>
    %c0_3 = arith.constant 0 : index
    %c0_4 = arith.constant 0 : index
    %2 = vector.load %arg15[%c0_3, %c0_4] : memref<1x128xf32, #tpu.memory_space<vmem>>, vector<1x128xf32>
    %c0_5 = arith.constant 0 : index
    %c0_6 = arith.constant 0 : index
    %3 = vector.load %arg2[%c0_5, %c0_6] : memref<128x256xf32, #tpu.memory_space<vmem>>, vector<128x256xf32>
    %cst = arith.constant dense<0.000000e+00> : vector<1x256xf32>
    %4 = tpu.matmul %0, %3, %cst {dimension_numbers = #tpu.dot_dimension_numbers<[1], [0], [0], [1], [0, 0, 1, 1], [], []>} : vector<1x128xf32>, vector<128x256xf32>, vector<1x256xf32> -> vector<1x256xf32>
    %c0_7 = arith.constant 0 : index
    %c0_8 = arith.constant 0 : index
    %5 = vector.load %arg6[%c0_7, %c0_8] : memref<128x256xf32, #tpu.memory_space<vmem>>, vector<128x256xf32>
    %cst_9 = arith.constant dense<0.000000e+00> : vector<1x256xf32>
    %6 = tpu.matmul %1, %5, %cst_9 {dimension_numbers = #tpu.dot_dimension_numbers<[1], [0], [0], [1], [0, 0, 1, 1], [], []>} : vector<1x128xf32>, vector<128x256xf32>, vector<1x256xf32> -> vector<1x256xf32>
    %c0_10 = arith.constant 0 : index
    %c0_11 = arith.constant 0 : index
    %7 = vector.load %arg10[%c0_10, %c0_11] : memref<128x256xf32, #tpu.memory_space<vmem>>, vector<128x256xf32>
    %cst_12 = arith.constant dense<0.000000e+00> : vector<1x256xf32>
    %8 = tpu.matmul %2, %7, %cst_12 {dimension_numbers = #tpu.dot_dimension_numbers<[1], [0], [0], [1], [0, 0, 1, 1], [], []>} : vector<1x128xf32>, vector<128x256xf32>, vector<1x256xf32> -> vector<1x256xf32>
    %c0_13 = arith.constant 0 : index
    %c0_14 = arith.constant 0 : index
    %9 = vector.load %arg0[%c0_13, %c0_14] : memref<1x128xf32, #tpu.memory_space<vmem>>, vector<1x128xf32>
    %c0_15 = arith.constant 0 : index
    %c0_16 = arith.constant 0 : index
    %10 = vector.load %arg1[%c0_15, %c0_16] : memref<128x384xf32, #tpu.memory_space<vmem>>, vector<128x384xf32>
    %cst_17 = arith.constant dense<0.000000e+00> : vector<1x384xf32>
    %11 = tpu.matmul %9, %10, %cst_17 {dimension_numbers = #tpu.dot_dimension_numbers<[1], [0], [0], [1], [0, 0, 1, 1], [], []>} : vector<1x128xf32>, vector<128x384xf32>, vector<1x384xf32> -> vector<1x384xf32>
    %c0_18 = arith.constant 0 : index
    %c0_19 = arith.constant 0 : index
    %12 = vector.load %arg4[%c0_18, %c0_19] : memref<1x384xf32, #tpu.memory_space<vmem>>, vector<1x384xf32>
    %13 = arith.addf %11, %12 : vector<1x384xf32>
    %14 = vector.extract_strided_slice %13 {offsets = [0, 0], sizes = [1, 256], strides = [1, 1]} : vector<1x384xf32> to vector<1x256xf32>
    %15 = arith.addf %14, %4 : vector<1x256xf32>
    %16 = vector.extract_strided_slice %15 {offsets = [0, 0], sizes = [1, 128], strides = [1, 1]} : vector<1x256xf32> to vector<1x128xf32>
    %17 = arith.negf %16 : vector<1x128xf32>
    %18 = math.exp %17 : vector<1x128xf32>
    %cst_20 = arith.constant 1.000000e+00 : f32
    %19 = vector.broadcast %cst_20 : f32 to vector<1x128xf32>
    %20 = arith.addf %19, %18 : vector<1x128xf32>
    %21 = arith.divf %19, %20 : vector<1x128xf32>
    %22 = vector.extract_strided_slice %15 {offsets = [0, 128], sizes = [1, 128], strides = [1, 1]} : vector<1x256xf32> to vector<1x128xf32>
    %23 = arith.negf %22 : vector<1x128xf32>
    %24 = math.exp %23 : vector<1x128xf32>
    %cst_21 = arith.constant 1.000000e+00 : f32
    %25 = vector.broadcast %cst_21 : f32 to vector<1x128xf32>
    %26 = arith.addf %25, %24 : vector<1x128xf32>
    %27 = arith.divf %25, %26 : vector<1x128xf32>
    %28 = arith.mulf %21, %0 : vector<1x128xf32>
    %29 = vector.extract_strided_slice %13 {offsets = [0, 256], sizes = [1, 128], strides = [1, 1]} : vector<1x384xf32> to vector<1x128xf32>
    %c0_22 = arith.constant 0 : index
    %c0_23 = arith.constant 0 : index
    %30 = vector.load %arg3[%c0_22, %c0_23] : memref<128x128xf32, #tpu.memory_space<vmem>>, vector<128x128xf32>
    %cst_24 = arith.constant dense<0.000000e+00> : vector<1x128xf32>
    %31 = tpu.matmul %28, %30, %cst_24 {dimension_numbers = #tpu.dot_dimension_numbers<[1], [0], [0], [1], [0, 0, 1, 1], [], []>} : vector<1x128xf32>, vector<128x128xf32>, vector<1x128xf32> -> vector<1x128xf32>
    %32 = arith.addf %29, %31 : vector<1x128xf32>
    %33 = arith.mulf %27, %0 : vector<1x128xf32>
    %cst_25 = arith.constant 1.000000e+00 : f32
    %34 = vector.broadcast %cst_25 : f32 to vector<1x128xf32>
    %35 = arith.subf %34, %27 : vector<1x128xf32>
    %36 = math.tanh %32 : vector<1x128xf32>
    %37 = arith.mulf %35, %36 : vector<1x128xf32>
    %38 = arith.addf %33, %37 : vector<1x128xf32>
    %c0_26 = arith.constant 0 : index
    %c0_27 = arith.constant 0 : index
    %39 = vector.load %arg16[%c0_26, %c0_27] : memref<1x128xf32, #tpu.memory_space<vmem>>, vector<1x128xf32>
    tpu.vector_store %arg16[%c0_26, %c0_27], %38 {strides = array<i32>} : memref<1x128xf32, #tpu.memory_space<vmem>>, vector<1x128xf32>,
    %c0_28 = arith.constant 0 : index
    %c0_29 = arith.constant 0 : index
    %40 = vector.load %arg5[%c0_28, %c0_29] : memref<128x384xf32, #tpu.memory_space<vmem>>, vector<128x384xf32>
    %cst_30 = arith.constant dense<0.000000e+00> : vector<1x384xf32>
    %41 = tpu.matmul %38, %40, %cst_30 {dimension_numbers = #tpu.dot_dimension_numbers<[1], [0], [0], [1], [0, 0, 1, 1], [], []>} : vector<1x128xf32>, vector<128x384xf32>, vector<1x384xf32> -> vector<1x384xf32>
    %c0_31 = arith.constant 0 : index
    %c0_32 = arith.constant 0 : index
    %42 = vector.load %arg8[%c0_31, %c0_32] : memref<1x384xf32, #tpu.memory_space<vmem>>, vector<1x384xf32>
    %43 = arith.addf %41, %42 : vector<1x384xf32>
    %44 = vector.extract_strided_slice %43 {offsets = [0, 0], sizes = [1, 256], strides = [1, 1]} : vector<1x384xf32> to vector<1x256xf32>
    %45 = arith.addf %44, %6 : vector<1x256xf32>
    %46 = vector.extract_strided_slice %45 {offsets = [0, 0], sizes = [1, 128], strides = [1, 1]} : vector<1x256xf32> to vector<1x128xf32>
    %47 = arith.negf %46 : vector<1x128xf32>
    %48 = math.exp %47 : vector<1x128xf32>
    %cst_33 = arith.constant 1.000000e+00 : f32
    %49 = vector.broadcast %cst_33 : f32 to vector<1x128xf32>
    %50 = arith.addf %49, %48 : vector<1x128xf32>
    %51 = arith.divf %49, %50 : vector<1x128xf32>
    %52 = vector.extract_strided_slice %45 {offsets = [0, 128], sizes = [1, 128], strides = [1, 1]} : vector<1x256xf32> to vector<1x128xf32>
    %53 = arith.negf %52 : vector<1x128xf32>
    %54 = math.exp %53 : vector<1x128xf32>
    %cst_34 = arith.constant 1.000000e+00 : f32
    %55 = vector.broadcast %cst_34 : f32 to vector<1x128xf32>
    %56 = arith.addf %55, %54 : vector<1x128xf32>
    %57 = arith.divf %55, %56 : vector<1x128xf32>
    %58 = arith.mulf %51, %1 : vector<1x128xf32>
    %59 = vector.extract_strided_slice %43 {offsets = [0, 256], sizes = [1, 128], strides = [1, 1]} : vector<1x384xf32> to vector<1x128xf32>
    %c0_35 = arith.constant 0 : index
    %c0_36 = arith.constant 0 : index
    %60 = vector.load %arg7[%c0_35, %c0_36] : memref<128x128xf32, #tpu.memory_space<vmem>>, vector<128x128xf32>
    %cst_37 = arith.constant dense<0.000000e+00> : vector<1x128xf32>
    %61 = tpu.matmul %58, %60, %cst_37 {dimension_numbers = #tpu.dot_dimension_numbers<[1], [0], [0], [1], [0, 0, 1, 1], [], []>} : vector<1x128xf32>, vector<128x128xf32>, vector<1x128xf32> -> vector<1x128xf32>
    %62 = arith.addf %59, %61 : vector<1x128xf32>
    %63 = arith.mulf %57, %1 : vector<1x128xf32>
    %cst_38 = arith.constant 1.000000e+00 : f32
    %64 = vector.broadcast %cst_38 : f32 to vector<1x128xf32>
    %65 = arith.subf %64, %57 : vector<1x128xf32>
    %66 = math.tanh %62 : vector<1x128xf32>
    %67 = arith.mulf %65, %66 : vector<1x128xf32>
    %68 = arith.addf %63, %67 : vector<1x128xf32>
    %c0_39 = arith.constant 0 : index
    %c0_40 = arith.constant 0 : index
    %69 = vector.load %arg17[%c0_39, %c0_40] : memref<1x128xf32, #tpu.memory_space<vmem>>, vector<1x128xf32>
    tpu.vector_store %arg17[%c0_39, %c0_40], %68 {strides = array<i32>} : memref<1x128xf32, #tpu.memory_space<vmem>>, vector<1x128xf32>,
    %c0_41 = arith.constant 0 : index
    %c0_42 = arith.constant 0 : index
    %70 = vector.load %arg9[%c0_41, %c0_42] : memref<128x384xf32, #tpu.memory_space<vmem>>, vector<128x384xf32>
    %cst_43 = arith.constant dense<0.000000e+00> : vector<1x384xf32>
    %71 = tpu.matmul %68, %70, %cst_43 {dimension_numbers = #tpu.dot_dimension_numbers<[1], [0], [0], [1], [0, 0, 1, 1], [], []>} : vector<1x128xf32>, vector<128x384xf32>, vector<1x384xf32> -> vector<1x384xf32>
    %c0_44 = arith.constant 0 : index
    %c0_45 = arith.constant 0 : index
    %72 = vector.load %arg12[%c0_44, %c0_45] : memref<1x384xf32, #tpu.memory_space<vmem>>, vector<1x384xf32>
    %73 = arith.addf %71, %72 : vector<1x384xf32>
    %74 = vector.extract_strided_slice %73 {offsets = [0, 0], sizes = [1, 256], strides = [1, 1]} : vector<1x384xf32> to vector<1x256xf32>
    %75 = arith.addf %74, %8 : vector<1x256xf32>
    %76 = vector.extract_strided_slice %75 {offsets = [0, 0], sizes = [1, 128], strides = [1, 1]} : vector<1x256xf32> to vector<1x128xf32>
    %77 = arith.negf %76 : vector<1x128xf32>
    %78 = math.exp %77 : vector<1x128xf32>
    %cst_46 = arith.constant 1.000000e+00 : f32
    %79 = vector.broadcast %cst_46 : f32 to vector<1x128xf32>
    %80 = arith.addf %79, %78 : vector<1x128xf32>
    %81 = arith.divf %79, %80 : vector<1x128xf32>
    %82 = vector.extract_strided_slice %75 {offsets = [0, 128], sizes = [1, 128], strides = [1, 1]} : vector<1x256xf32> to vector<1x128xf32>
    %83 = arith.negf %82 : vector<1x128xf32>
    %84 = math.exp %83 : vector<1x128xf32>
    %cst_47 = arith.constant 1.000000e+00 : f32
    %85 = vector.broadcast %cst_47 : f32 to vector<1x128xf32>
    %86 = arith.addf %85, %84 : vector<1x128xf32>
    %87 = arith.divf %85, %86 : vector<1x128xf32>
    %88 = arith.mulf %81, %2 : vector<1x128xf32>
    %89 = vector.extract_strided_slice %73 {offsets = [0, 256], sizes = [1, 128], strides = [1, 1]} : vector<1x384xf32> to vector<1x128xf32>
    %c0_48 = arith.constant 0 : index
    %c0_49 = arith.constant 0 : index
    %90 = vector.load %arg11[%c0_48, %c0_49] : memref<128x128xf32, #tpu.memory_space<vmem>>, vector<128x128xf32>
    %cst_50 = arith.constant dense<0.000000e+00> : vector<1x128xf32>
    %91 = tpu.matmul %88, %90, %cst_50 {dimension_numbers = #tpu.dot_dimension_numbers<[1], [0], [0], [1], [0, 0, 1, 1], [], []>} : vector<1x128xf32>, vector<128x128xf32>, vector<1x128xf32> -> vector<1x128xf32>
    %92 = arith.addf %89, %91 : vector<1x128xf32>
    %93 = arith.mulf %87, %2 : vector<1x128xf32>
    %cst_51 = arith.constant 1.000000e+00 : f32
    %94 = vector.broadcast %cst_51 : f32 to vector<1x128xf32>
    %95 = arith.subf %94, %87 : vector<1x128xf32>
    %96 = math.tanh %92 : vector<1x128xf32>
    %97 = arith.mulf %95, %96 : vector<1x128xf32>
    %98 = arith.addf %93, %97 : vector<1x128xf32>
    %c0_52 = arith.constant 0 : index
    %c0_53 = arith.constant 0 : index
    %99 = vector.load %arg18[%c0_52, %c0_53] : memref<1x128xf32, #tpu.memory_space<vmem>>, vector<1x128xf32>
    tpu.vector_store %arg18[%c0_52, %c0_53], %98 {strides = array<i32>} : memref<1x128xf32, #tpu.memory_space<vmem>>, vector<1x128xf32>,
    return
  }
}

</mosaic_0001>

<llo_original>
// kernel: multigru_step.1
$region0: #{multigru_step.1}
  #allocation0 [shape = 'u32[]', space=smem, size = 0x4, offset = 0x4, fixed_abs, tag = 'smem constant byte address 0x4 - core index']
  #allocation1 [shape = 'u32[72,128]{1,0:T(1,128)}', space=vmem, size = 0x9000, scoped, tag = 'internal scratch']
  %s0 = inlined_call_operand.vmem [shape: f32[1,128], index: 0, kind: input, shape index: {}]
  %s1 = inlined_call_operand.hbm [shape: f32[128,384], index: 1, kind: input, shape index: {}]
  %s2 = inlined_call_operand.hbm [shape: f32[128,256], index: 2, kind: input, shape index: {}]
  %s3 = inlined_call_operand.hbm [shape: f32[128,128], index: 3, kind: input, shape index: {}]
  %s4 = inlined_call_operand.vmem [shape: f32[1,384], index: 4, kind: input, shape index: {}]
  %s5 = inlined_call_operand.hbm [shape: f32[128,384], index: 5, kind: input, shape index: {}]
  %s6 = inlined_call_operand.hbm [shape: f32[128,256], index: 6, kind: input, shape index: {}]
  %s7 = inlined_call_operand.hbm [shape: f32[128,128], index: 7, kind: input, shape index: {}]
  %s8 = inlined_call_operand.vmem [shape: f32[1,384], index: 8, kind: input, shape index: {}]
  %s9 = inlined_call_operand.hbm [shape: f32[128,384], index: 9, kind: input, shape index: {}]
  %s10 = inlined_call_operand.hbm [shape: f32[128,256], index: 10, kind: input, shape index: {}]
  %s11 = inlined_call_operand.hbm [shape: f32[128,128], index: 11, kind: input, shape index: {}]
  %s12 = inlined_call_operand.vmem [shape: f32[1,384], index: 12, kind: input, shape index: {}]
  %s13 = inlined_call_operand.vmem [shape: f32[1,128], index: 13, kind: input, shape index: {}, may-alias: {13,16}]
  %s14 = inlined_call_operand.vmem [shape: f32[1,128], index: 14, kind: input, shape index: {}, may-alias: {14,17}]
  %s15 = inlined_call_operand.vmem [shape: f32[1,128], index: 15, kind: input, shape index: {}, may-alias: {15,18}]
  %s16 = inlined_call_operand.vmem [shape: f32[1,128], index: 16, kind: output, shape index: {0}, may-alias: {13,16}]
  %s17 = inlined_call_operand.vmem [shape: f32[1,128], index: 17, kind: output, shape index: {1}, may-alias: {14,17}]
  %s18 = inlined_call_operand.vmem [shape: f32[1,128], index: 18, kind: output, shape index: {2}, may-alias: {15,18}]
  %19 = xla_tuple %s16, %s17, %s18
  %s20 = sld [smem:[#allocation0]]
  $region126: #{multigru_step.1} parent=0
    _
  %s22 = ssub.s32 1, %s20
  %s23 = scalar_select 0, %s22, %s20
  $region1: #{multigru_step.1} parent=0
    #allocation2 [shape = 'u8[196608]{0}', space=vmem, size = 0x30000, scoped, tag = 'input window, operand 1, single buffered']
    #allocation3 [shape = 's32[1]{0}', space=sflag, size = 0x4, scoped, tag = 'scoped memory for multigru_step.1']
    #allocation4 [shape = 'u8[131072]{0}', space=vmem, size = 0x20000, scoped, tag = 'input window, operand 2, single buffered']
    #allocation5 [shape = 's32[1]{0}', space=sflag, size = 0x4, scoped, tag = 'scoped memory for multigru_step.1']
    #allocation6 [shape = 'u8[65536]{0}', space=vmem, size = 0x10000, scoped, tag = 'input window, operand 3, single buffered']
    #allocation7 [shape = 'u8[196608]{0}', space=vmem, size = 0x30000, scoped, tag = 'input window, operand 5, single buffered']
    #allocation8 [shape = 's32[1]{0}', space=sflag, size = 0x4, scoped, tag = 'scoped memory for multigru_step.1']
    #allocation9 [shape = 'u8[131072]{0}', space=vmem, size = 0x20000, scoped, tag = 'input window, operand 6, single buffered']
    #allocation10 [shape = 'u8[65536]{0}', space=vmem, size = 0x10000, scoped, tag = 'input window, operand 7, single buffered']
    #allocation11 [shape = 's32[1]{0}', space=sflag, size = 0x4, scoped, tag = 'scoped memory for multigru_step.1']
    #allocation12 [shape = 'u8[196608]{0}', space=vmem, size = 0x30000, scoped, tag = 'input window, operand 9, single buffered']
    #allocation13 [shape = 'u8[131072]{0}', space=vmem, size = 0x20000, scoped, tag = 'input window, operand 10, single buffered']
    #allocation14 [shape = 's32[1]{0}', space=sflag, size = 0x4, scoped, tag = 'scoped memory for multigru_step.1']
    #allocation15 [shape = 'u8[65536]{0}', space=vmem, size = 0x10000, scoped, tag = 'input window, operand 11, single buffered']
    %24 = vsyncpa [#allocation3], 0
    %25 = vsyncpa [#allocation5], 0
    %26 = vsyncpa [#allocation8], 0
    %27 = vsyncpa [#allocation11], 0
    %28 = vsyncpa [#allocation14], 0
    // Predicated region
    $region2: #{multigru_step.1} parent=1 // pred_check
      _
    $region3: #{multigru_step.1} parent=1 // pred_check_branch
      %30 = sbr.rel (0) target = $region5
    $region4: #{multigru_step.1} parent=1 // pred_region
      _
    $region5: #{multigru_step.1} parent=1 // pred_fallthru
      _
    // Predicated region
    $region6: #{multigru_step.1} parent=1 // pred_check
      _
    $region7: #{multigru_step.1} parent=1 // pred_check_branch
      %32 = sbr.rel (0) target = $region9
    $region8: #{multigru_step.1} parent=1 // pred_region
      %34 = vsyncadd [#allocation3], 0
      %s35 = sshll.u32 %s1, 4
      %s36 = int_to_ptr.hbm [resolvable:$true] %s35
      %s37 = sshll.u32 [#allocation2], 4
      %s38 = int_to_ptr.vmem [resolvable:$true] %s37
      %43 = dma.hbm_to_vmem [thread:$0]  %s36, 6144, %s38, [#allocation3], 384, 384, 24
    $region9: #{multigru_step.1} parent=1 // pred_fallthru
      _
    // Predicated region
    $region10: #{multigru_step.1} parent=1 // pred_check
      _
    $region11: #{multigru_step.1} parent=1 // pred_check_branch
      %45 = sbr.rel (0) target = $region13
    $region12: #{multigru_step.1} parent=1 // pred_region
      %47 = vsyncadd [#allocation5], 0
      %s48 = sshll.u32 %s2, 4
      %s49 = int_to_ptr.hbm [resolvable:$true] %s48
      %s50 = sshll.u32 [#allocation4], 4
      %s51 = int_to_ptr.vmem [resolvable:$true] %s50
      %56 = dma.hbm_to_vmem [thread:$0]  %s49, 4096, %s51, [#allocation5], 256, 256, 16
    $region13: #{multigru_step.1} parent=1 // pred_fallthru
      _
    // Predicated region
    $region14: #{multigru_step.1} parent=1 // pred_check
      _
    $region15: #{multigru_step.1} parent=1 // pred_check_branch
      %58 = sbr.rel (0) target = $region17
    $region16: #{multigru_step.1} parent=1 // pred_region
      %60 = vsyncadd [#allocation5], 0
      %s61 = sshll.u32 %s3, 4
      %s62 = int_to_ptr.hbm [resolvable:$true] %s61
      %s63 = sshll.u32 [#allocation6], 4
      %s64 = int_to_ptr.vmem [resolvable:$true] %s63
      %69 = dma.hbm_to_vmem [thread:$0]  %s62, 2048, %s64, [#allocation5], 128, 128, 8
    $region17: #{multigru_step.1} parent=1 // pred_fallthru
      _
    // Predicated region
    $region18: #{multigru_step.1} parent=1 // pred_check
      _
    $region19: #{multigru_step.1} parent=1 // pred_check_branch
      %71 = sbr.rel (0) target = $region21
    $region20: #{multigru_step.1} parent=1 // pred_region
      _
    $region21: #{multigru_step.1} parent=1 // pred_fallthru
      _
    // Predicated region
    $region22: #{multigru_step.1} parent=1 // pred_check
      _
    $region23: #{multigru_step.1} parent=1 // pred_check_branch
      %73 = sbr.rel (0) target = $region25
    $region24: #{multigru_step.1} parent=1 // pred_region
      %75 = vsyncadd [#allocation8], 0
      %s76 = sshll.u32 %s5, 4
      %s77 = int_to_ptr.hbm [resolvable:$true] %s76
      %s78 = sshll.u32 [#allocation7], 4
      %s79 = int_to_ptr.vmem [resolvable:$true] %s78
      %84 = dma.hbm_to_vmem [thread:$0]  %s77, 6144, %s79, [#allocation8], 384, 384, 24
    $region25: #{multigru_step.1} parent=1 // pred_fallthru
      _
    // Predicated region
    $region26: #{multigru_step.1} parent=1 // pred_check
      _
    $region27: #{multigru_step.1} parent=1 // pred_check_branch
      %86 = sbr.rel (0) target = $region29
    $region28: #{multigru_step.1} parent=1 // pred_region
      %88 = vsyncadd [#allocation8], 0
      %s89 = sshll.u32 %s6, 4
      %s90 = int_to_ptr.hbm [resolvable:$true] %s89
      %s91 = sshll.u32 [#allocation9], 4
      %s92 = int_to_ptr.vmem [resolvable:$true] %s91
      %97 = dma.hbm_to_vmem [thread:$0]  %s90, 4096, %s92, [#allocation8], 256, 256, 16
    $region29: #{multigru_step.1} parent=1 // pred_fallthru
      _
    // Predicated region
    $region30: #{multigru_step.1} parent=1 // pred_check
      _
    $region31: #{multigru_step.1} parent=1 // pred_check_branch
      %99 = sbr.rel (0) target = $region33
    $region32: #{multigru_step.1} parent=1 // pred_region
      %101 = vsyncadd [#allocation11], 0
      %s102 = sshll.u32 %s7, 4
      %s103 = int_to_ptr.hbm [resolvable:$true] %s102
      %s104 = sshll.u32 [#allocation10], 4
      %s105 = int_to_ptr.vmem [resolvable:$true] %s104
      %110 = dma.hbm_to_vmem [thread:$0]  %s103, 2048, %s105, [#allocation11], 128, 128, 8
    $region33: #{multigru_step.1} parent=1 // pred_fallthru
      _
    // Predicated region
    $region34: #{multigru_step.1} parent=1 // pred_check
      _
    $region35: #{multigru_step.1} parent=1 // pred_check_branch
      %112 = sbr.rel (0) target = $region37
    $region36: #{multigru_step.1} parent=1 // pred_region
      _
    $region37: #{multigru_step.1} parent=1 // pred_fallthru
      _
    // Predicated region
    $region38: #{multigru_step.1} parent=1 // pred_check
      _
    $region39: #{multigru_step.1} parent=1 // pred_check_branch
      %114 = sbr.rel (0) target = $region41
    $region40: #{multigru_step.1} parent=1 // pred_region
      %116 = vsyncadd [#allocation11], 0
      %s117 = sshll.u32 %s9, 4
      %s118 = int_to_ptr.hbm [resolvable:$true] %s117
      %s119 = sshll.u32 [#allocation12], 4
      %s120 = int_to_ptr.vmem [resolvable:$true] %s119
      %125 = dma.hbm_to_vmem [thread:$0]  %s118, 6144, %s120, [#allocation11], 384, 384, 24
    $region41: #{multigru_step.1} parent=1 // pred_fallthru
      _
    // Predicated region
    $region42: #{multigru_step.1} parent=1 // pred_check
      _
    $region43: #{multigru_step.1} parent=1 // pred_check_branch
      %127 = sbr.rel (0) target = $region45
    $region44: #{multigru_step.1} parent=1 // pred_region
      %129 = vsyncadd [#allocation14], 0
      %s130 = sshll.u32 %s10, 4
      %s131 = int_to_ptr.hbm [resolvable:$true] %s130
      %s132 = sshll.u32 [#allocation13], 4
      %s133 = int_to_ptr.vmem [resolvable:$true] %s132
      %138 = dma.hbm_to_vmem [thread:$0]  %s131, 4096, %s133, [#allocation14], 256, 256, 16
    $region45: #{multigru_step.1} parent=1 // pred_fallthru
      _
    // Predicated region
    $region46: #{multigru_step.1} parent=1 // pred_check
      _
    $region47: #{multigru_step.1} parent=1 // pred_check_branch
      %140 = sbr.rel (0) target = $region49
    $region48: #{multigru_step.1} parent=1 // pred_region
      %142 = vsyncadd [#allocation14], 0
      %s143 = sshll.u32 %s11, 4
      %s144 = int_to_ptr.hbm [resolvable:$true] %s143
      %s145 = sshll.u32 [#allocation15], 4
      %s146 = int_to_ptr.vmem [resolvable:$true] %s145
      %151 = dma.hbm_to_vmem [thread:$0]  %s144, 2048, %s146, [#allocation14], 128, 128, 8
    $region49: #{multigru_step.1} parent=1 // pred_fallthru
      _
    // Predicated region
    $region50: #{multigru_step.1} parent=1 // pred_check
      _
    $region51: #{multigru_step.1} parent=1 // pred_check_branch
      %153 = sbr.rel (0) target = $region53
    $region52: #{multigru_step.1} parent=1 // pred_region
      _
    $region53: #{multigru_step.1} parent=1 // pred_fallthru
      _
    // Predicated region
    $region54: #{multigru_step.1} parent=1 // pred_check
      _
    $region55: #{multigru_step.1} parent=1 // pred_check_branch
      %155 = sbr.rel (0) target = $region57
    $region56: #{multigru_step.1} parent=1 // pred_region
      _
    $region57: #{multigru_step.1} parent=1 // pred_fallthru
      _
    // Predicated region
    $region58: #{multigru_step.1} parent=1 // pred_check
      _
    $region59: #{multigru_step.1} parent=1 // pred_check_branch
      %157 = sbr.rel (0) target = $region61
    $region60: #{multigru_step.1} parent=1 // pred_region
      _
    $region61: #{multigru_step.1} parent=1 // pred_fallthru
      _
    // Predicated region
    $region62: #{multigru_step.1} parent=1 // pred_check
      _
    $region63: #{multigru_step.1} parent=1 // pred_check_branch
      %159 = sbr.rel (0) target = $region65
    $region64: #{multigru_step.1} parent=1 // pred_region
      _
    $region65: #{multigru_step.1} parent=1 // pred_fallthru
      _
    // Predicated region
    $region66: #{multigru_step.1} parent=1 // pred_check
      _
    $region67: #{multigru_step.1} parent=1 // pred_check_branch
      %161 = sbr.rel (0) target = $region69
    $region68: #{multigru_step.1} parent=1 // pred_region
      %163 = dma.done [#allocation3], 6144
    $region69: #{multigru_step.1} parent=1 // pred_fallthru
      _
    // Predicated region
    $region70: #{multigru_step.1} parent=1 // pred_check
      _
    $region71: #{multigru_step.1} parent=1 // pred_check_branch
      %165 = sbr.rel (0) target = $region73
    $region72: #{multigru_step.1} parent=1 // pred_region
      %167 = dma.done [#allocation5], 4096
    $region73: #{multigru_step.1} parent=1 // pred_fallthru
      _
    // Predicated region
    $region74: #{multigru_step.1} parent=1 // pred_check
      _
    $region75: #{multigru_step.1} parent=1 // pred_check_branch
      %169 = sbr.rel (0) target = $region77
    $region76: #{multigru_step.1} parent=1 // pred_region
      %171 = dma.done [#allocation5], 2048
    $region77: #{multigru_step.1} parent=1 // pred_fallthru
      _
    // Predicated region
    $region78: #{multigru_step.1} parent=1 // pred_check
      _
    $region79: #{multigru_step.1} parent=1 // pred_check_branch
      %173 = sbr.rel (0) target = $region81
    $region80: #{multigru_step.1} parent=1 // pred_region
      %175 = dma.done [#allocation8], 6144
    $region81: #{multigru_step.1} parent=1 // pred_fallthru
      _
    // Predicated region
    $region82: #{multigru_step.1} parent=1 // pred_check
      _
    $region83: #{multigru_step.1} parent=1 // pred_check_branch
      %177 = sbr.rel (0) target = $region85
    $region84: #{multigru_step.1} parent=1 // pred_region
      %179 = dma.done [#allocation8], 4096
    $region85: #{multigru_step.1} parent=1 // pred_fallthru
      _
    // Predicated region
    $region86: #{multigru_step.1} parent=1 // pred_check
      _
    $region87: #{multigru_step.1} parent=1 // pred_check_branch
      %181 = sbr.rel (0) target = $region89
    $region88: #{multigru_step.1} parent=1 // pred_region
      %183 = dma.done [#allocation11], 2048
    $region89: #{multigru_step.1} parent=1 // pred_fallthru
      _
    // Predicated region
    $region90: #{multigru_step.1} parent=1 // pred_check
      _
    $region91: #{multigru_step.1} parent=1 // pred_check_branch
      %185 = sbr.rel (0) target = $region93
    $region92: #{multigru_step.1} parent=1 // pred_region
      %187 = dma.done [#allocation11], 6144
    $region93: #{multigru_step.1} parent=1 // pred_fallthru
      _
    // Predicated region
    $region94: #{multigru_step.1} parent=1 // pred_check
      _
    $region95: #{multigru_step.1} parent=1 // pred_check_branch
      %189 = sbr.rel (0) target = $region97
    $region96: #{multigru_step.1} parent=1 // pred_region
      %191 = dma.done [#allocation14], 4096
    $region97: #{multigru_step.1} parent=1 // pred_fallthru
      _
    // Predicated region
    $region98: #{multigru_step.1} parent=1 // pred_check
      _
    $region99: #{multigru_step.1} parent=1 // pred_check_branch
      %193 = sbr.rel (0) target = $region101
    $region100: #{multigru_step.1} parent=1 // pred_region
      %195 = dma.done [#allocation14], 2048
    $region101: #{multigru_step.1} parent=1 // pred_fallthru
      _
    %v196 = vld [vmem:[%s13] sm:$0x1]
    %v197 = vld [vmem:[%s14] sm:$0x1]
    %v198 = vld [vmem:[%s15] sm:$0x1]
    %v199 = vld [vmem:[#allocation4] sm:$0xff]
    %v200 = vld [vmem:[#allocation4 + $0x8] sm:$0xff]
    %v201 = vld [vmem:[#allocation4 + $0x10] sm:$0xff]
    %v202 = vld [vmem:[#allocation4 + $0x18] sm:$0xff]
    %v203 = vld [vmem:[#allocation4 + $0x20] sm:$0xff]
    %v204 = vld [vmem:[#allocation4 + $0x28] sm:$0xff]
    %v205 = vld [vmem:[#allocation4 + $0x30] sm:$0xff]
    %v206 = vld [vmem:[#allocation4 + $0x38] sm:$0xff]
    %v207 = vld [vmem:[#allocation4 + $0x40] sm:$0xff]
    %v208 = vld [vmem:[#allocation4 + $0x48] sm:$0xff]
    %v209 = vld [vmem:[#allocation4 + $0x50] sm:$0xff]
    %v210 = vld [vmem:[#allocation4 + $0x58] sm:$0xff]
    %v211 = vld [vmem:[#allocation4 + $0x60] sm:$0xff]
    %v212 = vld [vmem:[#allocation4 + $0x68] sm:$0xff]
    %v213 = vld [vmem:[#allocation4 + $0x70] sm:$0xff]
    %v214 = vld [vmem:[#allocation4 + $0x78] sm:$0xff]
    %v215 = vld [vmem:[#allocation4 + $0x80] sm:$0xff]
    %v216 = vld [vmem:[#allocation4 + $0x88] sm:$0xff]
    %v217 = vld [vmem:[#allocation4 + $0x90] sm:$0xff]
    %v218 = vld [vmem:[#allocation4 + $0x98] sm:$0xff]
    %v219 = vld [vmem:[#allocation4 + $0xa0] sm:$0xff]
    %v220 = vld [vmem:[#allocation4 + $0xa8] sm:$0xff]
    %v221 = vld [vmem:[#allocation4 + $0xb0] sm:$0xff]
    %v222 = vld [vmem:[#allocation4 + $0xb8] sm:$0xff]
    %v223 = vld [vmem:[#allocation4 + $0xc0] sm:$0xff]
    %v224 = vld [vmem:[#allocation4 + $0xc8] sm:$0xff]
    %v225 = vld [vmem:[#allocation4 + $0xd0] sm:$0xff]
    %v226 = vld [vmem:[#allocation4 + $0xd8] sm:$0xff]
    %v227 = vld [vmem:[#allocation4 + $0xe0] sm:$0xff]
    %v228 = vld [vmem:[#allocation4 + $0xe8] sm:$0xff]
    %v229 = vld [vmem:[#allocation4 + $0xf0] sm:$0xff]
    %v230 = vld [vmem:[#allocation4 + $0xf8] sm:$0xff]
    %231 = vmatpush.msra.mxu0 %v229
    %232 = vmatpush.msra.mxu0 %v227
    %233 = vmatpush.msra.mxu0 %v225
    %234 = vmatpush.msra.mxu0 %v223
    %235 = vmatpush.msra.mxu0 %v221
    %236 = vmatpush.msra.mxu0 %v219
    %237 = vmatpush.msra.mxu0 %v217
    %238 = vmatpush.msra.mxu0 %v215
    %239 = vmatpush.msra.mxu0 %v213
    %240 = vmatpush.msra.mxu0 %v211
    %241 = vmatpush.msra.mxu0 %v209
    %242 = vmatpush.msra.mxu0 %v207
    %243 = vmatpush.msra.mxu0 %v205
    %244 = vmatpush.msra.mxu0 %v203
    %245 = vmatpush.msra.mxu0 %v201
    %246 = vmatpush.msra.mxu0 %v199
    %247 = vmatmul.f32.gmra.mxu0 %v196
    %v248 = vpop.f32.mrf.mxu0
    %v249 = vadd.f32 0.0, %v248
    %250 = vdwg.mxu0
    %251 = vmatpush.msra.mxu0 %v230
    %252 = vmatpush.msra.mxu0 %v228
    %253 = vmatpush.msra.mxu0 %v226
    %254 = vmatpush.msra.mxu0 %v224
    %255 = vmatpush.msra.mxu0 %v222
    %256 = vmatpush.msra.mxu0 %v220
    %257 = vmatpush.msra.mxu0 %v218
    %258 = vmatpush.msra.mxu0 %v216
    %259 = vmatpush.msra.mxu0 %v214
    %260 = vmatpush.msra.mxu0 %v212
    %261 = vmatpush.msra.mxu0 %v210
    %262 = vmatpush.msra.mxu0 %v208
    %263 = vmatpush.msra.mxu0 %v206
    %264 = vmatpush.msra.mxu0 %v204
    %265 = vmatpush.msra.mxu0 %v202
    %266 = vmatpush.msra.mxu0 %v200
    %267 = vmatmul.f32.gmra.mxu0 %v196
    %v268 = vpop.f32.mrf.mxu0
    %v269 = vadd.f32 0.0, %v268
    %270 = vdwg.mxu0
    %v271 = vld [vmem:[#allocation9] sm:$0xff]
    %v272 = vld [vmem:[#allocation9 + $0x8] sm:$0xff]
    %v273 = vld [vmem:[#allocation9 + $0x10] sm:$0xff]
    %v274 = vld [vmem:[#allocation9 + $0x18] sm:$0xff]
    %v275 = vld [vmem:[#allocation9 + $0x20] sm:$0xff]
    %v276 = vld [vmem:[#allocation9 + $0x28] sm:$0xff]
    %v277 = vld [vmem:[#allocation9 + $0x30] sm:$0xff]
    %v278 = vld [vmem:[#allocation9 + $0x38] sm:$0xff]
    %v279 = vld [vmem:[#allocation9 + $0x40] sm:$0xff]
    %v280 = vld [vmem:[#allocation9 + $0x48] sm:$0xff]
    %v281 = vld [vmem:[#allocation9 + $0x50] sm:$0xff]
    %v282 = vld [vmem:[#allocation9 + $0x58] sm:$0xff]
    %v283 = vld [vmem:[#allocation9 + $0x60] sm:$0xff]
    %v284 = vld [vmem:[#allocation9 + $0x68] sm:$0xff]
    %v285 = vld [vmem:[#allocation9 + $0x70] sm:$0xff]
    %v286 = vld [vmem:[#allocation9 + $0x78] sm:$0xff]
    %v287 = vld [vmem:[#allocation9 + $0x80] sm:$0xff]
    %v288 = vld [vmem:[#allocation9 + $0x88] sm:$0xff]
    %v289 = vld [vmem:[#allocation9 + $0x90] sm:$0xff]
    %v290 = vld [vmem:[#allocation9 + $0x98] sm:$0xff]
    %v291 = vld [vmem:[#allocation9 + $0xa0] sm:$0xff]
    %v292 = vld [vmem:[#allocation9 + $0xa8] sm:$0xff]
    %v293 = vld [vmem:[#allocation9 + $0xb0] sm:$0xff]
    %v294 = vld [vmem:[#allocation9 + $0xb8] sm:$0xff]
    %v295 = vld [vmem:[#allocation9 + $0xc0] sm:$0xff]
    %v296 = vld [vmem:[#allocation9 + $0xc8] sm:$0xff]
    %v297 = vld [vmem:[#allocation9 + $0xd0] sm:$0xff]
    %v298 = vld [vmem:[#allocation9 + $0xd8] sm:$0xff]
    %v299 = vld [vmem:[#allocation9 + $0xe0] sm:$0xff]
    %v300 = vld [vmem:[#allocation9 + $0xe8] sm:$0xff]
    %v301 = vld [vmem:[#allocation9 + $0xf0] sm:$0xff]
    %v302 = vld [vmem:[#allocation9 + $0xf8] sm:$0xff]
    %303 = vmatpush.msra.mxu0 %v301
    %304 = vmatpush.msra.mxu0 %v299
    %305 = vmatpush.msra.mxu0 %v297
    %306 = vmatpush.msra.mxu0 %v295
    %307 = vmatpush.msra.mxu0 %v293
    %308 = vmatpush.msra.mxu0 %v291
    %309 = vmatpush.msra.mxu0 %v289
    %310 = vmatpush.msra.mxu0 %v287
    %311 = vmatpush.msra.mxu0 %v285
    %312 = vmatpush.msra.mxu0 %v283
    %313 = vmatpush.msra.mxu0 %v281
    %314 = vmatpush.msra.mxu0 %v279
    %315 = vmatpush.msra.mxu0 %v277
    %316 = vmatpush.msra.mxu0 %v275
    %317 = vmatpush.msra.mxu0 %v273
    %318 = vmatpush.msra.mxu0 %v271
    %319 = vmatmul.f32.gmra.mxu0 %v197
    %v320 = vpop.f32.mrf.mxu0
    %v321 = vadd.f32 0.0, %v320
    %322 = vdwg.mxu0
    %323 = vmatpush.msra.mxu0 %v302
    %324 = vmatpush.msra.mxu0 %v300
    %325 = vmatpush.msra.mxu0 %v298
    %326 = vmatpush.msra.mxu0 %v296
    %327 = vmatpush.msra.mxu0 %v294
    %328 = vmatpush.msra.mxu0 %v292
    %329 = vmatpush.msra.mxu0 %v290
    %330 = vmatpush.msra.mxu0 %v288
    %331 = vmatpush.msra.mxu0 %v286
    %332 = vmatpush.msra.mxu0 %v284
    %333 = vmatpush.msra.mxu0 %v282
    %334 = vmatpush.msra.mxu0 %v280
    %335 = vmatpush.msra.mxu0 %v278
    %336 = vmatpush.msra.mxu0 %v276
    %337 = vmatpush.msra.mxu0 %v274
    %338 = vmatpush.msra.mxu0 %v272
    %339 = vmatmul.f32.gmra.mxu0 %v197
    %v340 = vpop.f32.mrf.mxu0
    %v341 = vadd.f32 0.0, %v340
    %342 = vdwg.mxu0
    %v343 = vld [vmem:[#allocation13] sm:$0xff]
    %v344 = vld [vmem:[#allocation13 + $0x8] sm:$0xff]
    %v345 = vld [vmem:[#allocation13 + $0x10] sm:$0xff]
    %v346 = vld [vmem:[#allocation13 + $0x18] sm:$0xff]
    %v347 = vld [vmem:[#allocation13 + $0x20] sm:$0xff]
    %v348 = vld [vmem:[#allocation13 + $0x28] sm:$0xff]
    %v349 = vld [vmem:[#allocation13 + $0x30] sm:$0xff]
    %v350 = vld [vmem:[#allocation13 + $0x38] sm:$0xff]
    %v351 = vld [vmem:[#allocation13 + $0x40] sm:$0xff]
    %v352 = vld [vmem:[#allocation13 + $0x48] sm:$0xff]
    %v353 = vld [vmem:[#allocation13 + $0x50] sm:$0xff]
    %v354 = vld [vmem:[#allocation13 + $0x58] sm:$0xff]
    %v355 = vld [vmem:[#allocation13 + $0x60] sm:$0xff]
    %v356 = vld [vmem:[#allocation13 + $0x68] sm:$0xff]
    %v357 = vld [vmem:[#allocation13 + $0x70] sm:$0xff]
    %v358 = vld [vmem:[#allocation13 + $0x78] sm:$0xff]
    %v359 = vld [vmem:[#allocation13 + $0x80] sm:$0xff]
    %v360 = vld [vmem:[#allocation13 + $0x88] sm:$0xff]
    %v361 = vld [vmem:[#allocation13 + $0x90] sm:$0xff]
    %v362 = vld [vmem:[#allocation13 + $0x98] sm:$0xff]
    %v363 = vld [vmem:[#allocation13 + $0xa0] sm:$0xff]
    %v364 = vld [vmem:[#allocation13 + $0xa8] sm:$0xff]
    %v365 = vld [vmem:[#allocation13 + $0xb0] sm:$0xff]
    %v366 = vld [vmem:[#allocation13 + $0xb8] sm:$0xff]
    %v367 = vld [vmem:[#allocation13 + $0xc0] sm:$0xff]
    %v368 = vld [vmem:[#allocation13 + $0xc8] sm:$0xff]
    %v369 = vld [vmem:[#allocation13 + $0xd0] sm:$0xff]
    %v370 = vld [vmem:[#allocation13 + $0xd8] sm:$0xff]
    %v371 = vld [vmem:[#allocation13 + $0xe0] sm:$0xff]
    %v372 = vld [vmem:[#allocation13 + $0xe8] sm:$0xff]
    %v373 = vld [vmem:[#allocation13 + $0xf0] sm:$0xff]
    %v374 = vld [vmem:[#allocation13 + $0xf8] sm:$0xff]
    %375 = vmatpush.msra.mxu0 %v373
    %376 = vmatpush.msra.mxu0 %v371
    %377 = vmatpush.msra.mxu0 %v369
    %378 = vmatpush.msra.mxu0 %v367
    %379 = vmatpush.msra.mxu0 %v365
    %380 = vmatpush.msra.mxu0 %v363
    %381 = vmatpush.msra.mxu0 %v361
    %382 = vmatpush.msra.mxu0 %v359
    %383 = vmatpush.msra.mxu0 %v357
    %384 = vmatpush.msra.mxu0 %v355
    %385 = vmatpush.msra.mxu0 %v353
    %386 = vmatpush.msra.mxu0 %v351
    %387 = vmatpush.msra.mxu0 %v349
    %388 = vmatpush.msra.mxu0 %v347
    %389 = vmatpush.msra.mxu0 %v345
    %390 = vmatpush.msra.mxu0 %v343
    %391 = vmatmul.f32.gmra.mxu0 %v198
    %v392 = vpop.f32.mrf.mxu0
    %v393 = vadd.f32 0.0, %v392
    %394 = vdwg.mxu0
    %395 = vmatpush.msra.mxu0 %v374
    %396 = vmatpush.msra.mxu0 %v372
    %397 = vmatpush.msra.mxu0 %v370
    %398 = vmatpush.msra.mxu0 %v368
    %399 = vmatpush.msra.mxu0 %v366
    %400 = vmatpush.msra.mxu0 %v364
    %401 = vmatpush.msra.mxu0 %v362
    %402 = vmatpush.msra.mxu0 %v360
    %403 = vmatpush.msra.mxu0 %v358
    %404 = vmatpush.msra.mxu0 %v356
    %405 = vmatpush.msra.mxu0 %v354
    %406 = vmatpush.msra.mxu0 %v352
    %407 = vmatpush.msra.mxu0 %v350
    %408 = vmatpush.msra.mxu0 %v348
    %409 = vmatpush.msra.mxu0 %v346
    %410 = vmatpush.msra.mxu0 %v344
    %411 = vmatmul.f32.gmra.mxu0 %v198
    %v412 = vpop.f32.mrf.mxu0
    %v413 = vadd.f32 0.0, %v412
    %414 = vdwg.mxu0
    %v415 = vld [vmem:[%s0] sm:$0x1]
    %v416 = vld [vmem:[#allocation2] sm:$0xff]
    %v417 = vld [vmem:[#allocation2 + $0x8] sm:$0xff]
    %v418 = vld [vmem:[#allocation2 + $0x10] sm:$0xff]
    %v419 = vld [vmem:[#allocation2 + $0x18] sm:$0xff]
    %v420 = vld [vmem:[#allocation2 + $0x20] sm:$0xff]
    %v421 = vld [vmem:[#allocation2 + $0x28] sm:$0xff]
    %v422 = vld [vmem:[#allocation2 + $0x30] sm:$0xff]
    %v423 = vld [vmem:[#allocation2 + $0x38] sm:$0xff]
    %v424 = vld [vmem:[#allocation2 + $0x40] sm:$0xff]
    %v425 = vld [vmem:[#allocation2 + $0x48] sm:$0xff]
    %v426 = vld [vmem:[#allocation2 + $0x50] sm:$0xff]
    %v427 = vld [vmem:[#allocation2 + $0x58] sm:$0xff]
    %v428 = vld [vmem:[#allocation2 + $0x60] sm:$0xff]
    %v429 = vld [vmem:[#allocation2 + $0x68] sm:$0xff]
    %v430 = vld [vmem:[#allocation2 + $0x70] sm:$0xff]
    %v431 = vld [vmem:[#allocation2 + $0x78] sm:$0xff]
    %v432 = vld [vmem:[#allocation2 + $0x80] sm:$0xff]
    %v433 = vld [vmem:[#allocation2 + $0x88] sm:$0xff]
    %v434 = vld [vmem:[#allocation2 + $0x90] sm:$0xff]
    %v435 = vld [vmem:[#allocation2 + $0x98] sm:$0xff]
    %v436 = vld [vmem:[#allocation2 + $0xa0] sm:$0xff]
    %v437 = vld [vmem:[#allocation2 + $0xa8] sm:$0xff]
    %v438 = vld [vmem:[#allocation2 + $0xb0] sm:$0xff]
    %v439 = vld [vmem:[#allocation2 + $0xb8] sm:$0xff]
    %v440 = vld [vmem:[#allocation2 + $0xc0] sm:$0xff]
    %v441 = vld [vmem:[#allocation2 + $0xc8] sm:$0xff]
    %v442 = vld [vmem:[#allocation2 + $0xd0] sm:$0xff]
    %v443 = vld [vmem:[#allocation2 + $0xd8] sm:$0xff]
    %v444 = vld [vmem:[#allocation2 + $0xe0] sm:$0xff]
    %v445 = vld [vmem:[#allocation2 + $0xe8] sm:$0xff]
    %v446 = vld [vmem:[#allocation2 + $0xf0] sm:$0xff]
    %v447 = vld [vmem:[#allocation2 + $0xf8] sm:$0xff]
    %v448 = vld [vmem:[#allocation2 + $0x100] sm:$0xff]
    %v449 = vld [vmem:[#allocation2 + $0x108] sm:$0xff]
    %v450 = vld [vmem:[#allocation2 + $0x110] sm:$0xff]
    %v451 = vld [vmem:[#allocation2 + $0x118] sm:$0xff]
    %v452 = vld [vmem:[#allocation2 + $0x120] sm:$0xff]
    %v453 = vld [vmem:[#allocation2 + $0x128] sm:$0xff]
    %v454 = vld [vmem:[#allocation2 + $0x130] sm:$0xff]
    %v455 = vld [vmem:[#allocation2 + $0x138] sm:$0xff]
    %v456 = vld [vmem:[#allocation2 + $0x140] sm:$0xff]
    %v457 = vld [vmem:[#allocation2 + $0x148] sm:$0xff]
    %v458 = vld [vmem:[#allocation2 + $0x150] sm:$0xff]
    %v459 = vld [vmem:[#allocation2 + $0x158] sm:$0xff]
    %v460 = vld [vmem:[#allocation2 + $0x160] sm:$0xff]
    %v461 = vld [vmem:[#allocation2 + $0x168] sm:$0xff]
    %v462 = vld [vmem:[#allocation2 + $0x170] sm:$0xff]
    %v463 = vld [vmem:[#allocation2 + $0x178] sm:$0xff]
    %v464 = vld [vmem:[%s4] sm:$0x7]
    %v466 = vperm.slane %v464, 0
    %v467 = vperm.slane %v464, 1
    %v468 = vperm.slane %v464, 2
    %472 = vmatpush.msra.mxu0 %v461
    %473 = vmatpush.msra.mxu0 %v458
    %474 = vmatpush.msra.mxu0 %v455
    %475 = vmatpush.msra.mxu0 %v452
    %476 = vmatpush.msra.mxu0 %v449
    %477 = vmatpush.msra.mxu0 %v446
    %478 = vmatpush.msra.mxu0 %v443
    %479 = vmatpush.msra.mxu0 %v440
    %480 = vmatpush.msra.mxu0 %v437
    %481 = vmatpush.msra.mxu0 %v434
    %482 = vmatpush.msra.mxu0 %v431
    %483 = vmatpush.msra.mxu0 %v428
    %484 = vmatpush.msra.mxu0 %v425
    %485 = vmatpush.msra.mxu0 %v422
    %486 = vmatpush.msra.mxu0 %v419
    %487 = vmatpush.msra.mxu0 %v416
    %488 = vmatmul.f32.gmra.mxu0 %v415
    %v489 = vpop.f32.mrf.mxu0
    %v490 = vadd.f32 %v466, %v489
    %491 = vdwg.mxu0
    %492 = vmatpush.msra.mxu0 %v462
    %493 = vmatpush.msra.mxu0 %v459
    %494 = vmatpush.msra.mxu0 %v456
    %495 = vmatpush.msra.mxu0 %v453
    %496 = vmatpush.msra.mxu0 %v450
    %497 = vmatpush.msra.mxu0 %v447
    %498 = vmatpush.msra.mxu0 %v444
    %499 = vmatpush.msra.mxu0 %v441
    %500 = vmatpush.msra.mxu0 %v438
    %501 = vmatpush.msra.mxu0 %v435
    %502 = vmatpush.msra.mxu0 %v432
    %503 = vmatpush.msra.mxu0 %v429
    %504 = vmatpush.msra.mxu0 %v426
    %505 = vmatpush.msra.mxu0 %v423
    %506 = vmatpush.msra.mxu0 %v420
    %507 = vmatpush.msra.mxu0 %v417
    %508 = vmatmul.f32.gmra.mxu0 %v415
    %v509 = vpop.f32.mrf.mxu0
    %v510 = vadd.f32 %v467, %v509
    %511 = vdwg.mxu0
    %512 = vmatpush.msra.mxu0 %v463
    %513 = vmatpush.msra.mxu0 %v460
    %514 = vmatpush.msra.mxu0 %v457
    %515 = vmatpush.msra.mxu0 %v454
    %516 = vmatpush.msra.mxu0 %v451
    %517 = vmatpush.msra.mxu0 %v448
    %518 = vmatpush.msra.mxu0 %v445
    %519 = vmatpush.msra.mxu0 %v442
    %520 = vmatpush.msra.mxu0 %v439
    %521 = vmatpush.msra.mxu0 %v436
    %522 = vmatpush.msra.mxu0 %v433
    %523 = vmatpush.msra.mxu0 %v430
    %524 = vmatpush.msra.mxu0 %v427
    %525 = vmatpush.msra.mxu0 %v424
    %526 = vmatpush.msra.mxu0 %v421
    %527 = vmatpush.msra.mxu0 %v418
    %528 = vmatmul.f32.gmra.mxu0 %v415
    %v529 = vpop.f32.mrf.mxu0
    %v530 = vadd.f32 %v468, %v529
    %531 = vdwg.mxu0
    %v532 = vadd.f32 %v490, %v249
    %v533 = vadd.f32 %v510, %v269
    %v534 = vxor.u32 %v532, 2147483648
    %v535 = vmul.f32 %v534, 1.442695
    %v536 = vpow.pop %v535
    %v537 = vadd.f32 %v536, 1.0
    %v538 = vrcp.pop %v537
    %v539 = vmul.f32 %v537, %v538
    %v540 = vsub.f32 1.0, %v539
    %v541 = vmul.f32 %v538, %v540
    %v542 = vadd.f32 %v538, %v541
    %vm543 = vweird.f32 %v537
    %vm544 = vweird.f32 %v538
    %vm545 = vmor %vm543, %vm544
    %v546 = vsel %vm545, %v538, %v542
    %v547 = vand.u32 2147483647, %v537
    %vm548 = vcmp.eq.f32.partialorder %v547, 8.507059e+37
    %v549 = vand.u32 %v537, 2147483648
    %v550 = vor.u32 1.1754944e-38, %v549
    %v551 = vsel %vm548, %v550, %v546
    %v552 = vmul.f32 1.0, %v551
    %v553 = vxor.u32 %v533, 2147483648
    %v554 = vmul.f32 %v553, 1.442695
    %v555 = vpow.pop %v554
    %v556 = vadd.f32 %v555, 1.0
    %v557 = vrcp.pop %v556
    %v558 = vmul.f32 %v556, %v557
    %v559 = vsub.f32 1.0, %v558
    %v560 = vmul.f32 %v557, %v559
    %v561 = vadd.f32 %v557, %v560
    %vm562 = vweird.f32 %v556
    %vm563 = vweird.f32 %v557
    %vm564 = vmor %vm562, %vm563
    %v565 = vsel %vm564, %v557, %v561
    %v566 = vand.u32 2147483647, %v556
    %vm567 = vcmp.eq.f32.partialorder %v566, 8.507059e+37
    %v568 = vand.u32 %v556, 2147483648
    %v569 = vor.u32 1.1754944e-38, %v568
    %v570 = vsel %vm567, %v569, %v565
    %v571 = vmul.f32 1.0, %v570
    %v572 = vmul.f32 %v552, %v196
    %v573 = vld [vmem:[#allocation6] sm:$0xff]
    %v574 = vld [vmem:[#allocation6 + $0x8] sm:$0xff]
    %v575 = vld [vmem:[#allocation6 + $0x10] sm:$0xff]
    %v576 = vld [vmem:[#allocation6 + $0x18] sm:$0xff]
    %v577 = vld [vmem:[#allocation6 + $0x20] sm:$0xff]
    %v578 = vld [vmem:[#allocation6 + $0x28] sm:$0xff]
    %v579 = vld [vmem:[#allocation6 + $0x30] sm:$0xff]
    %v580 = vld [vmem:[#allocation6 + $0x38] sm:$0xff]
    %v581 = vld [vmem:[#allocation6 + $0x40] sm:$0xff]
    %v582 = vld [vmem:[#allocation6 + $0x48] sm:$0xff]
    %v583 = vld [vmem:[#allocation6 + $0x50] sm:$0xff]
    %v584 = vld [vmem:[#allocation6 + $0x58] sm:$0xff]
    %v585 = vld [vmem:[#allocation6 + $0x60] sm:$0xff]
    %v586 = vld [vmem:[#allocation6 + $0x68] sm:$0xff]
    %v587 = vld [vmem:[#allocation6 + $0x70] sm:$0xff]
    %v588 = vld [vmem:[#allocation6 + $0x78] sm:$0xff]
    %589 = vmatpush.msra.mxu0 %v588
    %590 = vmatpush.msra.mxu0 %v587
    %591 = vmatpush.msra.mxu0 %v586
    %592 = vmatpush.msra.mxu0 %v585
    %593 = vmatpush.msra.mxu0 %v584
    %594 = vmatpush.msra.mxu0 %v583
    %595 = vmatpush.msra.mxu0 %v582
    %596 = vmatpush.msra.mxu0 %v581
    %597 = vmatpush.msra.mxu0 %v580
    %598 = vmatpush.msra.mxu0 %v579
    %599 = vmatpush.msra.mxu0 %v578
    %600 = vmatpush.msra.mxu0 %v577
    %601 = vmatpush.msra.mxu0 %v576
    %602 = vmatpush.msra.mxu0 %v575
    %603 = vmatpush.msra.mxu0 %v574
    %604 = vmatpush.msra.mxu0 %v573
    %605 = vmatmul.f32.gmra.mxu0 %v572
    %v606 = vpop.f32.mrf.mxu0
    %v607 = vadd.f32 0.0, %v606
    %608 = vdwg.mxu0
    %v609 = vadd.f32 %v530, %v607
    %v610 = vmul.f32 %v571, %v196
    %v611 = vsub.f32 1.0, %v571
    %v612 = vtanh.pop %v609
    %v613 = vmul.f32 %v611, %v612
    %v614 = vadd.f32 %v610, %v613
    %615 = vst [vmem:[%s16] sm:$0x1] %v614
    %v616 = vld [vmem:[#allocation7] sm:$0xff]
    %v617 = vld [vmem:[#allocation7 + $0x8] sm:$0xff]
    %v618 = vld [vmem:[#allocation7 + $0x10] sm:$0xff]
    %v619 = vld [vmem:[#allocation7 + $0x18] sm:$0xff]
    %v620 = vld [vmem:[#allocation7 + $0x20] sm:$0xff]
    %v621 = vld [vmem:[#allocation7 + $0x28] sm:$0xff]
    %v622 = vld [vmem:[#allocation7 + $0x30] sm:$0xff]
    %v623 = vld [vmem:[#allocation7 + $0x38] sm:$0xff]
    %v624 = vld [vmem:[#allocation7 + $0x40] sm:$0xff]
    %v625 = vld [vmem:[#allocation7 + $0x48] sm:$0xff]
    %v626 = vld [vmem:[#allocation7 + $0x50] sm:$0xff]
    %v627 = vld [vmem:[#allocation7 + $0x58] sm:$0xff]
    %v628 = vld [vmem:[#allocation7 + $0x60] sm:$0xff]
    %v629 = vld [vmem:[#allocation7 + $0x68] sm:$0xff]
    %v630 = vld [vmem:[#allocation7 + $0x70] sm:$0xff]
    %v631 = vld [vmem:[#allocation7 + $0x78] sm:$0xff]
    %v632 = vld [vmem:[#allocation7 + $0x80] sm:$0xff]
    %v633 = vld [vmem:[#allocation7 + $0x88] sm:$0xff]
    %v634 = vld [vmem:[#allocation7 + $0x90] sm:$0xff]
    %v635 = vld [vmem:[#allocation7 + $0x98] sm:$0xff]
    %v636 = vld [vmem:[#allocation7 + $0xa0] sm:$0xff]
    %v637 = vld [vmem:[#allocation7 + $0xa8] sm:$0xff]
    %v638 = vld [vmem:[#allocation7 + $0xb0] sm:$0xff]
    %v639 = vld [vmem:[#allocation7 + $0xb8] sm:$0xff]
    %v640 = vld [vmem:[#allocation7 + $0xc0] sm:$0xff]
    %v641 = vld [vmem:[#allocation7 + $0xc8] sm:$0xff]
    %v642 = vld [vmem:[#allocation7 + $0xd0] sm:$0xff]
    %v643 = vld [vmem:[#allocation7 + $0xd8] sm:$0xff]
    %v644 = vld [vmem:[#allocation7 + $0xe0] sm:$0xff]
    %v645 = vld [vmem:[#allocation7 + $0xe8] sm:$0xff]
    %v646 = vld [vmem:[#allocation7 + $0xf0] sm:$0xff]
    %v647 = vld [vmem:[#allocation7 + $0xf8] sm:$0xff]
    %v648 = vld [vmem:[#allocation7 + $0x100] sm:$0xff]
    %v649 = vld [vmem:[#allocation7 + $0x108] sm:$0xff]
    %v650 = vld [vmem:[#allocation7 + $0x110] sm:$0xff]
    %v651 = vld [vmem:[#allocation7 + $0x118] sm:$0xff]
    %v652 = vld [vmem:[#allocation7 + $0x120] sm:$0xff]
    %v653 = vld [vmem:[#allocation7 + $0x128] sm:$0xff]
    %v654 = vld [vmem:[#allocation7 + $0x130] sm:$0xff]
    %v655 = vld [vmem:[#allocation7 + $0x138] sm:$0xff]
    %v656 = vld [vmem:[#allocation7 + $0x140] sm:$0xff]
    %v657 = vld [vmem:[#allocation7 + $0x148] sm:$0xff]
    %v658 = vld [vmem:[#allocation7 + $0x150] sm:$0xff]
    %v659 = vld [vmem:[#allocation7 + $0x158] sm:$0xff]
    %v660 = vld [vmem:[#allocation7 + $0x160] sm:$0xff]
    %v661 = vld [vmem:[#allocation7 + $0x168] sm:$0xff]
    %v662 = vld [vmem:[#allocation7 + $0x170] sm:$0xff]
    %v663 = vld [vmem:[#allocation7 + $0x178] sm:$0xff]
    %v664 = vld [vmem:[%s8] sm:$0x7]
    %v666 = vperm.slane %v664, 0
    %v667 = vperm.slane %v664, 1
    %v668 = vperm.slane %v664, 2
    %672 = vmatpush.msra.mxu0 %v661
    %673 = vmatpush.msra.mxu0 %v658
    %674 = vmatpush.msra.mxu0 %v655
    %675 = vmatpush.msra.mxu0 %v652
    %676 = vmatpush.msra.mxu0 %v649
    %677 = vmatpush.msra.mxu0 %v646
    %678 = vmatpush.msra.mxu0 %v643
    %679 = vmatpush.msra.mxu0 %v640
    %680 = vmatpush.msra.mxu0 %v637
    %681 = vmatpush.msra.mxu0 %v634
    %682 = vmatpush.msra.mxu0 %v631
    %683 = vmatpush.msra.mxu0 %v628
    %684 = vmatpush.msra.mxu0 %v625
    %685 = vmatpush.msra.mxu0 %v622
    %686 = vmatpush.msra.mxu0 %v619
    %687 = vmatpush.msra.mxu0 %v616
    %688 = vmatmul.f32.gmra.mxu0 %v614
    %v689 = vpop.f32.mrf.mxu0
    %v690 = vadd.f32 %v666, %v689
    %691 = vdwg.mxu0
    %692 = vmatpush.msra.mxu0 %v662
    %693 = vmatpush.msra.mxu0 %v659
    %694 = vmatpush.msra.mxu0 %v656
    %695 = vmatpush.msra.mxu0 %v653
    %696 = vmatpush.msra.mxu0 %v650
    %697 = vmatpush.msra.mxu0 %v647
    %698 = vmatpush.msra.mxu0 %v644
    %699 = vmatpush.msra.mxu0 %v641
    %700 = vmatpush.msra.mxu0 %v638
    %701 = vmatpush.msra.mxu0 %v635
    %702 = vmatpush.msra.mxu0 %v632
    %703 = vmatpush.msra.mxu0 %v629
    %704 = vmatpush.msra.mxu0 %v626
    %705 = vmatpush.msra.mxu0 %v623
    %706 = vmatpush.msra.mxu0 %v620
    %707 = vmatpush.msra.mxu0 %v617
    %708 = vmatmul.f32.gmra.mxu0 %v614
    %v709 = vpop.f32.mrf.mxu0
    %v710 = vadd.f32 %v667, %v709
    %711 = vdwg.mxu0
    %712 = vmatpush.msra.mxu0 %v663
    %713 = vmatpush.msra.mxu0 %v660
    %714 = vmatpush.msra.mxu0 %v657
    %715 = vmatpush.msra.mxu0 %v654
    %716 = vmatpush.msra.mxu0 %v651
    %717 = vmatpush.msra.mxu0 %v648
    %718 = vmatpush.msra.mxu0 %v645
    %719 = vmatpush.msra.mxu0 %v642
    %720 = vmatpush.msra.mxu0 %v639
    %721 = vmatpush.msra.mxu0 %v636
    %722 = vmatpush.msra.mxu0 %v633
    %723 = vmatpush.msra.mxu0 %v630
    %724 = vmatpush.msra.mxu0 %v627
    %725 = vmatpush.msra.mxu0 %v624
    %726 = vmatpush.msra.mxu0 %v621
    %727 = vmatpush.msra.mxu0 %v618
    %728 = vmatmul.f32.gmra.mxu0 %v614
    %v729 = vpop.f32.mrf.mxu0
    %v730 = vadd.f32 %v668, %v729
    %731 = vdwg.mxu0
    %v732 = vadd.f32 %v690, %v321
    %v733 = vadd.f32 %v710, %v341
    %v734 = vxor.u32 %v732, 2147483648
    %v735 = vmul.f32 %v734, 1.442695
    %v736 = vpow.pop %v735
    %v737 = vadd.f32 %v736, 1.0
    %v738 = vrcp.pop %v737
    %v739 = vmul.f32 %v737, %v738
    %v740 = vsub.f32 1.0, %v739
    %v741 = vmul.f32 %v738, %v740
    %v742 = vadd.f32 %v738, %v741
    %vm743 = vweird.f32 %v737
    %vm744 = vweird.f32 %v738
    %vm745 = vmor %vm743, %vm744
    %v746 = vsel %vm745, %v738, %v742
    %v747 = vand.u32 2147483647, %v737
    %vm748 = vcmp.eq.f32.partialorder %v747, 8.507059e+37
    %v749 = vand.u32 %v737, 2147483648
    %v750 = vor.u32 1.1754944e-38, %v749
    %v751 = vsel %vm748, %v750, %v746
    %v752 = vmul.f32 1.0, %v751
    %v753 = vxor.u32 %v733, 2147483648
    %v754 = vmul.f32 %v753, 1.442695
    %v755 = vpow.pop %v754
    %v756 = vadd.f32 %v755, 1.0
    %v757 = vrcp.pop %v756
    %v758 = vmul.f32 %v756, %v757
    %v759 = vsub.f32 1.0, %v758
    %v760 = vmul.f32 %v757, %v759
    %v761 = vadd.f32 %v757, %v760
    %vm762 = vweird.f32 %v756
    %vm763 = vweird.f32 %v757
    %vm764 = vmor %vm762, %vm763
    %v765 = vsel %vm764, %v757, %v761
    %v766 = vand.u32 2147483647, %v756
    %vm767 = vcmp.eq.f32.partialorder %v766, 8.507059e+37
    %v768 = vand.u32 %v756, 2147483648
    %v769 = vor.u32 1.1754944e-38, %v768
    %v770 = vsel %vm767, %v769, %v765
    %v771 = vmul.f32 1.0, %v770
    %v772 = vmul.f32 %v752, %v197
    %v773 = vld [vmem:[#allocation10] sm:$0xff]
    %v774 = vld [vmem:[#allocation10 + $0x8] sm:$0xff]
    %v775 = vld [vmem:[#allocation10 + $0x10] sm:$0xff]
    %v776 = vld [vmem:[#allocation10 + $0x18] sm:$0xff]
    %v777 = vld [vmem:[#allocation10 + $0x20] sm:$0xff]
    %v778 = vld [vmem:[#allocation10 + $0x28] sm:$0xff]
    %v779 = vld [vmem:[#allocation10 + $0x30] sm:$0xff]
    %v780 = vld [vmem:[#allocation10 + $0x38] sm:$0xff]
    %v781 = vld [vmem:[#allocation10 + $0x40] sm:$0xff]
    %v782 = vld [vmem:[#allocation10 + $0x48] sm:$0xff]
    %v783 = vld [vmem:[#allocation10 + $0x50] sm:$0xff]
    %v784 = vld [vmem:[#allocation10 + $0x58] sm:$0xff]
    %v785 = vld [vmem:[#allocation10 + $0x60] sm:$0xff]
    %v786 = vld [vmem:[#allocation10 + $0x68] sm:$0xff]
    %v787 = vld [vmem:[#allocation10 + $0x70] sm:$0xff]
    %v788 = vld [vmem:[#allocation10 + $0x78] sm:$0xff]
    %789 = vmatpush.msra.mxu0 %v788
    %790 = vmatpush.msra.mxu0 %v787
    %791 = vmatpush.msra.mxu0 %v786
    %792 = vmatpush.msra.mxu0 %v785
    %793 = vmatpush.msra.mxu0 %v784
    %794 = vmatpush.msra.mxu0 %v783
    %795 = vmatpush.msra.mxu0 %v782
    %796 = vmatpush.msra.mxu0 %v781
    %797 = vmatpush.msra.mxu0 %v780
    %798 = vmatpush.msra.mxu0 %v779
    %799 = vmatpush.msra.mxu0 %v778
    %800 = vmatpush.msra.mxu0 %v777
    %801 = vmatpush.msra.mxu0 %v776
    %802 = vmatpush.msra.mxu0 %v775
    %803 = vmatpush.msra.mxu0 %v774
    %804 = vmatpush.msra.mxu0 %v773
    %805 = vmatmul.f32.gmra.mxu0 %v772
    %v806 = vpop.f32.mrf.mxu0
    %v807 = vadd.f32 0.0, %v806
    %808 = vdwg.mxu0
    %v809 = vadd.f32 %v730, %v807
    %v810 = vmul.f32 %v771, %v197
    %v811 = vsub.f32 1.0, %v771
    %v812 = vtanh.pop %v809
    %v813 = vmul.f32 %v811, %v812
    %v814 = vadd.f32 %v810, %v813
    %815 = vst [vmem:[%s17] sm:$0x1] %v814
    %v816 = vld [vmem:[#allocation12] sm:$0xff]
    %v817 = vld [vmem:[#allocation12 + $0x8] sm:$0xff]
    %v818 = vld [vmem:[#allocation12 + $0x10] sm:$0xff]
    %v819 = vld [vmem:[#allocation12 + $0x18] sm:$0xff]
    %v820 = vld [vmem:[#allocation12 + $0x20] sm:$0xff]
    %v821 = vld [vmem:[#allocation12 + $0x28] sm:$0xff]
    %v822 = vld [vmem:[#allocation12 + $0x30] sm:$0xff]
    %v823 = vld [vmem:[#allocation12 + $0x38] sm:$0xff]
    %v824 = vld [vmem:[#allocation12 + $0x40] sm:$0xff]
    %v825 = vld [vmem:[#allocation12 + $0x48] sm:$0xff]
    %v826 = vld [vmem:[#allocation12 + $0x50] sm:$0xff]
    %v827 = vld [vmem:[#allocation12 + $0x58] sm:$0xff]
    %v828 = vld [vmem:[#allocation12 + $0x60] sm:$0xff]
    %v829 = vld [vmem:[#allocation12 + $0x68] sm:$0xff]
    %v830 = vld [vmem:[#allocation12 + $0x70] sm:$0xff]
    %v831 = vld [vmem:[#allocation12 + $0x78] sm:$0xff]
    %v832 = vld [vmem:[#allocation12 + $0x80] sm:$0xff]
    %v833 = vld [vmem:[#allocation12 + $0x88] sm:$0xff]
    %v834 = vld [vmem:[#allocation12 + $0x90] sm:$0xff]
    %v835 = vld [vmem:[#allocation12 + $0x98] sm:$0xff]
    %v836 = vld [vmem:[#allocation12 + $0xa0] sm:$0xff]
    %v837 = vld [vmem:[#allocation12 + $0xa8] sm:$0xff]
    %v838 = vld [vmem:[#allocation12 + $0xb0] sm:$0xff]
    %v839 = vld [vmem:[#allocation12 + $0xb8] sm:$0xff]
    %v840 = vld [vmem:[#allocation12 + $0xc0] sm:$0xff]
    %v841 = vld [vmem:[#allocation12 + $0xc8] sm:$0xff]
    %v842 = vld [vmem:[#allocation12 + $0xd0] sm:$0xff]
    %v843 = vld [vmem:[#allocation12 + $0xd8] sm:$0xff]
    %v844 = vld [vmem:[#allocation12 + $0xe0] sm:$0xff]
    %v845 = vld [vmem:[#allocation12 + $0xe8] sm:$0xff]
    %v846 = vld [vmem:[#allocation12 + $0xf0] sm:$0xff]
    %v847 = vld [vmem:[#allocation12 + $0xf8] sm:$0xff]
    %v848 = vld [vmem:[#allocation12 + $0x100] sm:$0xff]
    %v849 = vld [vmem:[#allocation12 + $0x108] sm:$0xff]
    %v850 = vld [vmem:[#allocation12 + $0x110] sm:$0xff]
    %v851 = vld [vmem:[#allocation12 + $0x118] sm:$0xff]
    %v852 = vld [vmem:[#allocation12 + $0x120] sm:$0xff]
    %v853 = vld [vmem:[#allocation12 + $0x128] sm:$0xff]
    %v854 = vld [vmem:[#allocation12 + $0x130] sm:$0xff]
    %v855 = vld [vmem:[#allocation12 + $0x138] sm:$0xff]
    %v856 = vld [vmem:[#allocation12 + $0x140] sm:$0xff]
    %v857 = vld [vmem:[#allocation12 + $0x148] sm:$0xff]
    %v858 = vld [vmem:[#allocation12 + $0x150] sm:$0xff]
    %v859 = vld [vmem:[#allocation12 + $0x158] sm:$0xff]
    %v860 = vld [vmem:[#allocation12 + $0x160] sm:$0xff]
    %v861 = vld [vmem:[#allocation12 + $0x168] sm:$0xff]
    %v862 = vld [vmem:[#allocation12 + $0x170] sm:$0xff]
    %v863 = vld [vmem:[#allocation12 + $0x178] sm:$0xff]
    %v864 = vld [vmem:[%s12] sm:$0x7]
    %v866 = vperm.slane %v864, 0
    %v867 = vperm.slane %v864, 1
    %v868 = vperm.slane %v864, 2
    %872 = vmatpush.msra.mxu0 %v861
    %873 = vmatpush.msra.mxu0 %v858
    %874 = vmatpush.msra.mxu0 %v855
    %875 = vmatpush.msra.mxu0 %v852
    %876 = vmatpush.msra.mxu0 %v849
    %877 = vmatpush.msra.mxu0 %v846
    %878 = vmatpush.msra.mxu0 %v843
    %879 = vmatpush.msra.mxu0 %v840
    %880 = vmatpush.msra.mxu0 %v837
    %881 = vmatpush.msra.mxu0 %v834
    %882 = vmatpush.msra.mxu0 %v831
    %883 = vmatpush.msra.mxu0 %v828
    %884 = vmatpush.msra.mxu0 %v825
    %885 = vmatpush.msra.mxu0 %v822
    %886 = vmatpush.msra.mxu0 %v819
    %887 = vmatpush.msra.mxu0 %v816
    %888 = vmatmul.f32.gmra.mxu0 %v814
    %v889 = vpop.f32.mrf.mxu0
    %v890 = vadd.f32 %v866, %v889
    %891 = vdwg.mxu0
    %892 = vmatpush.msra.mxu0 %v862
    %893 = vmatpush.msra.mxu0 %v859
    %894 = vmatpush.msra.mxu0 %v856
    %895 = vmatpush.msra.mxu0 %v853
    %896 = vmatpush.msra.mxu0 %v850
    %897 = vmatpush.msra.mxu0 %v847
    %898 = vmatpush.msra.mxu0 %v844
    %899 = vmatpush.msra.mxu0 %v841
    %900 = vmatpush.msra.mxu0 %v838
    %901 = vmatpush.msra.mxu0 %v835
    %902 = vmatpush.msra.mxu0 %v832
    %903 = vmatpush.msra.mxu0 %v829
    %904 = vmatpush.msra.mxu0 %v826
    %905 = vmatpush.msra.mxu0 %v823
    %906 = vmatpush.msra.mxu0 %v820
    %907 = vmatpush.msra.mxu0 %v817
    %908 = vmatmul.f32.gmra.mxu0 %v814
    %v909 = vpop.f32.mrf.mxu0
    %v910 = vadd.f32 %v867, %v909
    %911 = vdwg.mxu0
    %912 = vmatpush.msra.mxu0 %v863
    %913 = vmatpush.msra.mxu0 %v860
    %914 = vmatpush.msra.mxu0 %v857
    %915 = vmatpush.msra.mxu0 %v854
    %916 = vmatpush.msra.mxu0 %v851
    %917 = vmatpush.msra.mxu0 %v848
    %918 = vmatpush.msra.mxu0 %v845
    %919 = vmatpush.msra.mxu0 %v842
    %920 = vmatpush.msra.mxu0 %v839
    %921 = vmatpush.msra.mxu0 %v836
    %922 = vmatpush.msra.mxu0 %v833
    %923 = vmatpush.msra.mxu0 %v830
    %924 = vmatpush.msra.mxu0 %v827
    %925 = vmatpush.msra.mxu0 %v824
    %926 = vmatpush.msra.mxu0 %v821
    %927 = vmatpush.msra.mxu0 %v818
    %928 = vmatmul.f32.gmra.mxu0 %v814
    %v929 = vpop.f32.mrf.mxu0
    %v930 = vadd.f32 %v868, %v929
    %931 = vdwg.mxu0
    %v932 = vadd.f32 %v890, %v393
    %v933 = vadd.f32 %v910, %v413
    %v934 = vxor.u32 %v932, 2147483648
    %v935 = vmul.f32 %v934, 1.442695
    %v936 = vpow.pop %v935
    %v937 = vadd.f32 %v936, 1.0
    %v938 = vrcp.pop %v937
    %v939 = vmul.f32 %v937, %v938
    %v940 = vsub.f32 1.0, %v939
    %v941 = vmul.f32 %v938, %v940
    %v942 = vadd.f32 %v938, %v941
    %vm943 = vweird.f32 %v937
    %vm944 = vweird.f32 %v938
    %vm945 = vmor %vm943, %vm944
    %v946 = vsel %vm945, %v938, %v942
    %v947 = vand.u32 2147483647, %v937
    %vm948 = vcmp.eq.f32.partialorder %v947, 8.507059e+37
    %v949 = vand.u32 %v937, 2147483648
    %v950 = vor.u32 1.1754944e-38, %v949
    %v951 = vsel %vm948, %v950, %v946
    %v952 = vmul.f32 1.0, %v951
    %v953 = vxor.u32 %v933, 2147483648
    %v954 = vmul.f32 %v953, 1.442695
    %v955 = vpow.pop %v954
    %v956 = vadd.f32 %v955, 1.0
    %v957 = vrcp.pop %v956
    %v958 = vmul.f32 %v956, %v957
    %v959 = vsub.f32 1.0, %v958
    %v960 = vmul.f32 %v957, %v959
    %v961 = vadd.f32 %v957, %v960
    %vm962 = vweird.f32 %v956
    %vm963 = vweird.f32 %v957
    %vm964 = vmor %vm962, %vm963
    %v965 = vsel %vm964, %v957, %v961
    %v966 = vand.u32 2147483647, %v956
    %vm967 = vcmp.eq.f32.partialorder %v966, 8.507059e+37
    %v968 = vand.u32 %v956, 2147483648
    %v969 = vor.u32 1.1754944e-38, %v968
    %v970 = vsel %vm967, %v969, %v965
    %v971 = vmul.f32 1.0, %v970
    %v972 = vmul.f32 %v952, %v198
    %v973 = vld [vmem:[#allocation15] sm:$0xff]
    %v974 = vld [vmem:[#allocation15 + $0x8] sm:$0xff]
    %v975 = vld [vmem:[#allocation15 + $0x10] sm:$0xff]
    %v976 = vld [vmem:[#allocation15 + $0x18] sm:$0xff]
    %v977 = vld [vmem:[#allocation15 + $0x20] sm:$0xff]
    %v978 = vld [vmem:[#allocation15 + $0x28] sm:$0xff]
    %v979 = vld [vmem:[#allocation15 + $0x30] sm:$0xff]
    %v980 = vld [vmem:[#allocation15 + $0x38] sm:$0xff]
    %v981 = vld [vmem:[#allocation15 + $0x40] sm:$0xff]
    %v982 = vld [vmem:[#allocation15 + $0x48] sm:$0xff]
    %v983 = vld [vmem:[#allocation15 + $0x50] sm:$0xff]
    %v984 = vld [vmem:[#allocation15 + $0x58] sm:$0xff]
    %v985 = vld [vmem:[#allocation15 + $0x60] sm:$0xff]
    %v986 = vld [vmem:[#allocation15 + $0x68] sm:$0xff]
    %v987 = vld [vmem:[#allocation15 + $0x70] sm:$0xff]
    %v988 = vld [vmem:[#allocation15 + $0x78] sm:$0xff]
    %989 = vmatpush.msra.mxu0 %v988
    %990 = vmatpush.msra.mxu0 %v987
    %991 = vmatpush.msra.mxu0 %v986
    %992 = vmatpush.msra.mxu0 %v985
    %993 = vmatpush.msra.mxu0 %v984
    %994 = vmatpush.msra.mxu0 %v983
    %995 = vmatpush.msra.mxu0 %v982
    %996 = vmatpush.msra.mxu0 %v981
    %997 = vmatpush.msra.mxu0 %v980
    %998 = vmatpush.msra.mxu0 %v979
    %999 = vmatpush.msra.mxu0 %v978
    %1000 = vmatpush.msra.mxu0 %v977
    %1001 = vmatpush.msra.mxu0 %v976
    %1002 = vmatpush.msra.mxu0 %v975
    %1003 = vmatpush.msra.mxu0 %v974
    %1004 = vmatpush.msra.mxu0 %v973
    %1005 = vmatmul.f32.gmra.mxu0 %v972
    %v1006 = vpop.f32.mrf.mxu0
    %v1007 = vadd.f32 0.0, %v1006
    %1008 = vdwg.mxu0
    %v1009 = vadd.f32 %v930, %v1007
    %v1010 = vmul.f32 %v971, %v198
    %v1011 = vsub.f32 1.0, %v971
    %v1012 = vtanh.pop %v1009
    %v1013 = vmul.f32 %v1011, %v1012
    %v1014 = vadd.f32 %v1010, %v1013
    %1015 = vst [vmem:[%s18] sm:$0x1] %v1014
    // Predicated region
    $region102: #{multigru_step.1} parent=1 // pred_check
      _
    $region103: #{multigru_step.1} parent=1 // pred_check_branch
      %1017 = sbr.rel (0) target = $region105
    $region104: #{multigru_step.1} parent=1 // pred_region
      _
    $region105: #{multigru_step.1} parent=1 // pred_fallthru
      _
    // Predicated region
    $region106: #{multigru_step.1} parent=1 // pred_check
      _
    $region107: #{multigru_step.1} parent=1 // pred_check_branch
      %1019 = sbr.rel (0) target = $region109
    $region108: #{multigru_step.1} parent=1 // pred_region
      _
    $region109: #{multigru_step.1} parent=1 // pred_fallthru
      _
    // Predicated region
    $region110: #{multigru_step.1} parent=1 // pred_check
      _
    $region111: #{multigru_step.1} parent=1 // pred_check_branch
      %1021 = sbr.rel (0) target = $region113
    $region112: #{multigru_step.1} parent=1 // pred_region
      _
    $region113: #{multigru_step.1} parent=1 // pred_fallthru
      _
    // Predicated region
    $region114: #{multigru_step.1} parent=1 // pred_check
      _
    $region115: #{multigru_step.1} parent=1 // pred_check_branch
      %1023 = sbr.rel (0) target = $region117
    $region116: #{multigru_step.1} parent=1 // pred_region
      _
    $region117: #{multigru_step.1} parent=1 // pred_fallthru
      _
    // Predicated region
    $region118: #{multigru_step.1} parent=1 // pred_check
      _
    $region119: #{multigru_step.1} parent=1 // pred_check_branch
      %1025 = sbr.rel (0) target = $region121
    $region120: #{multigru_step.1} parent=1 // pred_region
      _
    $region121: #{multigru_step.1} parent=1 // pred_fallthru
      _
    // Predicated region
    $region122: #{multigru_step.1} parent=1 // pred_check
      _
    $region123: #{multigru_step.1} parent=1 // pred_check_branch
      %1027 = sbr.rel (0) target = $region125
    $region124: #{multigru_step.1} parent=1 // pred_region
      _
    $region125: #{multigru_step.1} parent=1 // pred_fallthru
      _
    %1028 = vsyncpa [#allocation3], 1
    %1029 = vsyncpa [#allocation5], 1
    %1030 = vsyncpa [#allocation8], 1
    %1031 = vsyncpa [#allocation11], 1
    %1032 = vsyncpa [#allocation14], 1

</llo_original>
